<compile_context>
chip_gen: v7x
topology: tpu7x:2x2x1
jax: 0.10.0
libtpu: 0.0.40
codegen_flags: <defaults>
</compile_context>

<pallas_src>
import jax
import jax.numpy as jnp
from jax.experimental import pallas as pl
from jax.experimental.pallas import tpu as pltpu

N_OBS = 7            # matches the 7-element normalization_vector
N_ACT = 2
HIDDEN = 64

NORMALIZATION_VECTOR = jnp.array([300.0, 300.0, 300.0, 100.0, 100.0, 1000.0, 1000.0],
                                 dtype=jnp.float32)


def critic_kernel(s_ref, a_ref, w1s_ref, w1a_ref, b1_ref, w2_ref, b2_ref,
                  w3_ref, b3_ref, out_ref):
    # Batch-in-lanes: s_ref (7, tb), a_ref (2, tb), activations (64, tb).
    # First layer: split matmul replaces the concat; normalization is pre-folded into w1s.
    h1 = (jnp.dot(w1s_ref[...], s_ref[...], preferred_element_type=jnp.float32)
          + jnp.dot(w1a_ref[...], a_ref[...], preferred_element_type=jnp.float32)
          + b1_ref[...])                                   # (64,1) bias lane-broadcasts
    h1 = jnp.maximum(h1, 0.0)
    h2 = jnp.dot(w2_ref[...], h1, preferred_element_type=jnp.float32) + b2_ref[...]
    h2 = jnp.maximum(h2, 0.0)
    # Final 64->1 layer: (1,64) @ (64,tb) -> (1,tb).  Natively lane-dense store,
    # no masked writes, no cross-lane reduction.
    out_ref[...] = (jnp.dot(w3_ref[...], h2, preferred_element_type=jnp.float32)
                    + b3_ref[0, 0])


def prepare_params(raw_params):
    """One-time transform of PyTorch-layout params into kernel layout:
       - fold 1/normalization into the state columns of W1
       - split W1 into state / action parts, store all weights (out, in)
       - biases as (HIDDEN, 1) columns, W3 as a (1, HIDDEN) row, b3 as an SMEM scalar."""
    w1, b1, w2, b2, w3, b3 = raw_params            # w*: [in, out], b*: [1, out]
    inv_norm = (1.0 / NORMALIZATION_VECTOR).reshape(N_OBS, 1)
    w1s = (w1[:N_OBS, :] * inv_norm).T             # (64, 7)  normalization folded in
    w1a = w1[N_OBS:, :].T                          # (64, 2)
    b1c = b1.reshape(HIDDEN, 1)                    # (64, 1)
    w2t = w2.T                                     # (64, 64) so h2 = w2t @ h1
    b2c = b2.reshape(HIDDEN, 1)                    # (64, 1)
    w3r = w3.reshape(1, HIDDEN)                    # (1, 64)
    b3s = b3.reshape(1, 1)                         # (1, 1) -> SMEM scalar
    return (w1s, w1a, b1c, w2t, b2c, w3r, b3s)


def critic_forward(state, action, kparams, *, block_b=2048):
    """state: [B, N_OBS], action: [B, N_ACT] -> [B, 1] (float32)."""
    w1s, w1a, b1, w2, b2, w3, b3 = kparams
    B = state.shape[0]

    # Batch-in-lanes: present inputs transposed so the batch sits on the 128-lane axis.
    s_t = state.astype(jnp.float32).T              # (N_OBS, B)
    a_t = action.astype(jnp.float32).T             # (N_ACT, B)

    if B <= block_b:
        # Whole batch in one grid step: block == full array (no (8,128) divisibility
        # constraint), no padding, no per-step overhead, no 2-TC split of tiny work.
        tb = B
    else:
        # Large batches: 2048-row tiles (multiple of 128).  The ragged tail block is
        # handled by Pallas (out-of-bounds writes are masked), so no wrapper pad copy.
        tb = block_b
    grid = (pl.cdiv(B, tb),)

    row_spec = lambda d: pl.BlockSpec((d, tb), lambda i: (0, i))     # batch-tiled (lane axis)
    rep_spec = lambda r, c: pl.BlockSpec((r, c), lambda i: (0, 0))   # replicated weights
    # (weight index maps are constant across the grid, so Pallas does not re-DMA them per step)

    out = pl.pallas_call(
        critic_kernel,
        out_shape=jax.ShapeDtypeStruct((1, B), jnp.float32),
        grid=grid,
        in_specs=[
            row_spec(N_OBS),                                 # state.T block  (7, tb)
            row_spec(N_ACT),                                 # action.T block (2, tb)
            rep_spec(HIDDEN, N_OBS),                         # w1s (norm folded in)
            rep_spec(HIDDEN, N_ACT),                         # w1a
            rep_spec(HIDDEN, 1),                             # b1 column
            rep_spec(HIDDEN, HIDDEN),                        # w2 (out, in)
            rep_spec(HIDDEN, 1),                             # b2 column
            rep_spec(1, HIDDEN),                             # w3 row
            pl.BlockSpec(memory_space=pltpu.MemorySpace.SMEM),   # b3 scalar
        ],
        out_specs=pl.BlockSpec((1, tb), lambda i: (0, i)),   # lane-dense (1, tb) output rows
        compiler_params=pltpu.CompilerParams(
            # Only >1 grid step when each tile already holds >= block_b rows, so the v7x
            # two-TC split is effectively gated on per-core work being large enough.
            dimension_semantics=("parallel",)),
    )(s_t, a_t, w1s, w1a, b1, w2, b2, w3, b3)

    return out[0, :B].reshape(B, 1)


def init_params(key):
    """Deterministic init matching PyTorch nn.Linear default (uniform +/- 1/sqrt(fan_in)).
    Weights stored in math layout [in, out], so the reference math is x @ W."""
    d_in = N_OBS + N_ACT
    ks = jax.random.split(key, 6)

    def linear(kw, kb, fan_in, fan_out):
        bound = 1.0 / jnp.sqrt(jnp.float32(fan_in))
        w = jax.random.uniform(kw, (fan_in, fan_out), jnp.float32, -bound, bound)
        b = jax.random.uniform(kb, (1, fan_out), jnp.float32, -bound, bound)
        return w, b

    w1, b1 = linear(ks[0], ks[1], d_in, HIDDEN)
    w2, b2 = linear(ks[2], ks[3], HIDDEN, HIDDEN)
    w3, b3 = linear(ks[4], ks[5], HIDDEN, 1)
    return (w1, b1, w2, b2, w3, b3)


def reference_forward(state, action, raw_params):
    w1, b1, w2, b2, w3, b3 = raw_params
    s = state / NORMALIZATION_VECTOR[None, :]
    x = jnp.concatenate([s, action], axis=1)
    h1 = jnp.maximum(x @ w1 + b1, 0.0)
    h2 = jnp.maximum(h1 @ w2 + b2, 0.0)
    return h2 @ w3 + b3


if __name__ == "__main__":
    BATCH = 256   # <= 2048 -> single grid step, no padding, lane-dense (1, 256) output

    key = jax.random.PRNGKey(0)
    k_state, k_action, k_params = jax.random.split(key, 3)

    state = jax.random.normal(k_state, (BATCH, N_OBS), jnp.float32) * 100.0
    action = jax.random.normal(k_action, (BATCH, N_ACT), jnp.float32)

    raw_params = init_params(k_params)
    kparams = prepare_params(raw_params)     # one-time weight transform

    out = critic_forward(state, action, kparams)
    out = jax.block_until_ready(out)

    ref = reference_forward(state, action, raw_params)
    assert out.shape == (BATCH, 1)
    assert jnp.allclose(out, ref, atol=1e-4, rtol=1e-4), "mismatch vs reference"

    print("KERNEL_OK")
</pallas_src>

<mosaic_0001>
module attributes {stable_mosaic.version = 11 : i64} {
  func.func @critic_kernel(%arg0: i32, %arg1: memref<7x256xf32, #tpu.memory_space<vmem>>, %arg2: memref<2x256xf32, #tpu.memory_space<vmem>>, %arg3: memref<64x7xf32, #tpu.memory_space<vmem>>, %arg4: memref<64x2xf32, #tpu.memory_space<vmem>>, %arg5: memref<64x1xf32, #tpu.memory_space<vmem>>, %arg6: memref<64x64xf32, #tpu.memory_space<vmem>>, %arg7: memref<64x1xf32, #tpu.memory_space<vmem>>, %arg8: memref<1x64xf32, #tpu.memory_space<vmem>>, %arg9: memref<1x1xf32, #tpu.memory_space<smem>>, %arg10: memref<1x256xf32, #tpu.memory_space<vmem>>) attributes {dimension_semantics = [#tpu.dimension_semantics<parallel>], iteration_bounds = array<i64: 1>, scalar_prefetch = 0 : i64, scratch_operands = 0 : i64, tpu.core_type = #tpu.core_type<tc>, window_params = [{transform_indices = @transform_0, window_bounds = array<i64: 7, 256>}, {transform_indices = @transform_1, window_bounds = array<i64: 2, 256>}, {pipeline_mode = #tpu.pipeline_mode<synchronous>, transform_indices = @transform_2, window_bounds = array<i64: 64, 7>}, {pipeline_mode = #tpu.pipeline_mode<synchronous>, transform_indices = @transform_3, window_bounds = array<i64: 64, 2>}, {pipeline_mode = #tpu.pipeline_mode<synchronous>, transform_indices = @transform_4, window_bounds = array<i64: 64, 1>}, {pipeline_mode = #tpu.pipeline_mode<synchronous>, transform_indices = @transform_5, window_bounds = array<i64: 64, 64>}, {pipeline_mode = #tpu.pipeline_mode<synchronous>, transform_indices = @transform_6, window_bounds = array<i64: 64, 1>}, {pipeline_mode = #tpu.pipeline_mode<synchronous>, transform_indices = @transform_7, window_bounds = array<i64: 1, 64>}, {transform_indices = @transform_8, window_bounds = array<i64: 1, 1>}, {transform_indices = @transform_9, window_bounds = array<i64: 1, 256>}]} {
    %c0 = arith.constant 0 : index
    %c0_0 = arith.constant 0 : index
    %0 = vector.load %arg3[%c0, %c0_0] : memref<64x7xf32, #tpu.memory_space<vmem>>, vector<64x7xf32>
    %c0_1 = arith.constant 0 : index
    %c0_2 = arith.constant 0 : index
    %1 = vector.load %arg1[%c0_1, %c0_2] : memref<7x256xf32, #tpu.memory_space<vmem>>, vector<7x256xf32>
    %cst = arith.constant dense<0.000000e+00> : vector<64x256xf32>
    %2 = tpu.matmul %0, %1, %cst {dimension_numbers = #tpu.dot_dimension_numbers<[1], [0], [0], [1], [0, 0, 1, 1], [], []>} : vector<64x7xf32>, vector<7x256xf32>, vector<64x256xf32> -> vector<64x256xf32>
    %c0_3 = arith.constant 0 : index
    %c0_4 = arith.constant 0 : index
    %3 = vector.load %arg4[%c0_3, %c0_4] : memref<64x2xf32, #tpu.memory_space<vmem>>, vector<64x2xf32>
    %c0_5 = arith.constant 0 : index
    %c0_6 = arith.constant 0 : index
    %4 = vector.load %arg2[%c0_5, %c0_6] : memref<2x256xf32, #tpu.memory_space<vmem>>, vector<2x256xf32>
    %cst_7 = arith.constant dense<0.000000e+00> : vector<64x256xf32>
    %5 = tpu.matmul %3, %4, %cst_7 {dimension_numbers = #tpu.dot_dimension_numbers<[1], [0], [0], [1], [0, 0, 1, 1], [], []>} : vector<64x2xf32>, vector<2x256xf32>, vector<64x256xf32> -> vector<64x256xf32>
    %6 = arith.addf %2, %5 : vector<64x256xf32>
    %c0_8 = arith.constant 0 : index
    %c0_9 = arith.constant 0 : index
    %7 = vector.load %arg5[%c0_8, %c0_9] : memref<64x1xf32, #tpu.memory_space<vmem>>, vector<64x1xf32>
    %8 = vector.broadcast %7 : vector<64x1xf32> to vector<64x256xf32>
    %9 = arith.addf %6, %8 : vector<64x256xf32>
    %cst_10 = arith.constant 0.000000e+00 : f32
    %10 = vector.broadcast %cst_10 : f32 to vector<64x256xf32>
    %11 = arith.maximumf %9, %10 : vector<64x256xf32>
    %c0_11 = arith.constant 0 : index
    %c0_12 = arith.constant 0 : index
    %12 = vector.load %arg6[%c0_11, %c0_12] : memref<64x64xf32, #tpu.memory_space<vmem>>, vector<64x64xf32>
    %cst_13 = arith.constant dense<0.000000e+00> : vector<64x256xf32>
    %13 = tpu.matmul %12, %11, %cst_13 {dimension_numbers = #tpu.dot_dimension_numbers<[1], [0], [0], [1], [0, 0, 1, 1], [], []>} : vector<64x64xf32>, vector<64x256xf32>, vector<64x256xf32> -> vector<64x256xf32>
    %c0_14 = arith.constant 0 : index
    %c0_15 = arith.constant 0 : index
    %14 = vector.load %arg7[%c0_14, %c0_15] : memref<64x1xf32, #tpu.memory_space<vmem>>, vector<64x1xf32>
    %15 = vector.broadcast %14 : vector<64x1xf32> to vector<64x256xf32>
    %16 = arith.addf %13, %15 : vector<64x256xf32>
    %cst_16 = arith.constant 0.000000e+00 : f32
    %17 = vector.broadcast %cst_16 : f32 to vector<64x256xf32>
    %18 = arith.maximumf %16, %17 : vector<64x256xf32>
    %c0_17 = arith.constant 0 : index
    %c0_18 = arith.constant 0 : index
    %19 = vector.load %arg8[%c0_17, %c0_18] : memref<1x64xf32, #tpu.memory_space<vmem>>, vector<1x64xf32>
    %cst_19 = arith.constant dense<0.000000e+00> : vector<1x256xf32>
    %20 = tpu.matmul %19, %18, %cst_19 {dimension_numbers = #tpu.dot_dimension_numbers<[1], [0], [0], [1], [0, 0, 1, 1], [], []>} : vector<1x64xf32>, vector<64x256xf32>, vector<1x256xf32> -> vector<1x256xf32>
    %c0_20 = arith.constant 0 : index
    %c0_21 = arith.constant 0 : index
    %21 = memref.load %arg9[%c0_20, %c0_21] : memref<1x1xf32, #tpu.memory_space<smem>>
    %22 = vector.broadcast %21 : f32 to vector<1x256xf32>
    %23 = arith.addf %20, %22 : vector<1x256xf32>
    %c0_22 = arith.constant 0 : index
    %c0_23 = arith.constant 0 : index
    %24 = vector.load %arg10[%c0_22, %c0_23] : memref<1x256xf32, #tpu.memory_space<vmem>>, vector<1x256xf32>
    tpu.vector_store %arg10[%c0_22, %c0_23], %23 {strides = array<i32>} : memref<1x256xf32, #tpu.memory_space<vmem>>, vector<1x256xf32>,
    return
  }
  func.func @transform_0(%arg0: i32) -> (i32, i32) {
    %c0_i32 = arith.constant 0 : i32
    %c0_i32_0 = arith.constant 0 : i32
    return %c0_i32, %arg0 : i32, i32
  }
  func.func @transform_1(%arg0: i32) -> (i32, i32) {
    %c0_i32 = arith.constant 0 : i32
    %c0_i32_0 = arith.constant 0 : i32
    return %c0_i32, %arg0 : i32, i32
  }
  func.func @transform_2(%arg0: i32) -> (i32, i32) {
    %c0_i32 = arith.constant 0 : i32
    %c0_i32_0 = arith.constant 0 : i32
    %c0_i32_1 = arith.constant 0 : i32
    return %c0_i32, %c0_i32_0 : i32, i32
  }
  func.func @transform_3(%arg0: i32) -> (i32, i32) {
    %c0_i32 = arith.constant 0 : i32
    %c0_i32_0 = arith.constant 0 : i32
    %c0_i32_1 = arith.constant 0 : i32
    return %c0_i32, %c0_i32_0 : i32, i32
  }
  func.func @transform_4(%arg0: i32) -> (i32, i32) {
    %c0_i32 = arith.constant 0 : i32
    %c0_i32_0 = arith.constant 0 : i32
    %c0_i32_1 = arith.constant 0 : i32
    return %c0_i32, %c0_i32_0 : i32, i32
  }
  func.func @transform_5(%arg0: i32) -> (i32, i32) {
    %c0_i32 = arith.constant 0 : i32
    %c0_i32_0 = arith.constant 0 : i32
    %c0_i32_1 = arith.constant 0 : i32
    return %c0_i32, %c0_i32_0 : i32, i32
  }
  func.func @transform_6(%arg0: i32) -> (i32, i32) {
    %c0_i32 = arith.constant 0 : i32
    %c0_i32_0 = arith.constant 0 : i32
    %c0_i32_1 = arith.constant 0 : i32
    return %c0_i32, %c0_i32_0 : i32, i32
  }
  func.func @transform_7(%arg0: i32) -> (i32, i32) {
    %c0_i32 = arith.constant 0 : i32
    %c0_i32_0 = arith.constant 0 : i32
    %c0_i32_1 = arith.constant 0 : i32
    return %c0_i32, %c0_i32_0 : i32, i32
  }
  func.func @transform_8(%arg0: i32) -> (i32, i32) {
    %c0_i32 = arith.constant 0 : i32
    %c0_i32_0 = arith.constant 0 : i32
    %c0_i32_1 = arith.constant 0 : i32
    return %c0_i32, %c0_i32_0 : i32, i32
  }
  func.func @transform_9(%arg0: i32) -> (i32, i32) {
    %c0_i32 = arith.constant 0 : i32
    %c0_i32_0 = arith.constant 0 : i32
    return %c0_i32, %arg0 : i32, i32
  }
}

</mosaic_0001>

<llo_original>
// kernel: tpu_custom_call.1
$region0: #{tpu_custom_call.1}
  #allocation0 [shape = 'u32[]', space=smem, size = 0x4, offset = 0x4, fixed_abs, tag = 'smem constant byte address 0x4 - core index']
  #allocation1 [shape = 'u32[144,128]{1,0:T(1,128)}', space=vmem, size = 0x12000, scoped, tag = 'internal scratch']
  #allocation2 [shape = 'f32[1,1]{1,0:T(1,128)S(6)}', space=smem, size = 0x200, scoped, tag = 'scoped memory for tpu_custom_call.1']
  %s0 = inlined_call_operand.vmem [shape: f32[7,256], index: 0, kind: input, shape index: {}]
  %s1 = inlined_call_operand.vmem [shape: f32[2,256], index: 1, kind: input, shape index: {}]
  %s2 = inlined_call_operand.vmem [shape: f32[64,7], index: 2, kind: input, shape index: {}]
  %s3 = inlined_call_operand.vmem [shape: f32[64,2], index: 3, kind: input, shape index: {}]
  %s4 = inlined_call_operand.vmem [shape: f32[64,1], index: 4, kind: input, shape index: {}]
  %s5 = inlined_call_operand.vmem [shape: f32[64,64], index: 5, kind: input, shape index: {}]
  %s6 = inlined_call_operand.vmem [shape: f32[64,1], index: 6, kind: input, shape index: {}]
  %s7 = inlined_call_operand.vmem [shape: f32[1,64], index: 7, kind: input, shape index: {}]
  %s8 = inlined_call_operand.<no memory space> [shape: f32[1,1], index: 8, kind: input, shape index: {}]
  %s9 = inlined_call_operand.hbm [shape: f32[1,256], index: 9, kind: output, shape index: {}]
  %s10 = sld [smem:[#allocation0]]
  $region46: #{tpu_custom_call.1} parent=0
    _
  %s12 = ssub.s32 1, %s10
  %s13 = scalar_select 0, %s12, %s10
  %14 = sst [smem:[#allocation2]] %s8
  $region1: #{tpu_custom_call.1} parent=0
    #allocation3 [shape = 'u8[1024]{0}', space=vmem, size = 0x400, scoped, tag = 'output window, operand 0, single buffered']
    #allocation4 [shape = 's32[1]{0}', space=sflag, size = 0x4, scoped, tag = 'scoped memory for tpu_custom_call.1']
    %15 = vsyncpa [#allocation4], 0
    // Predicated region
    $region2: #{tpu_custom_call.1} parent=1 // pred_check
      _
    $region3: #{tpu_custom_call.1} parent=1 // pred_check_branch
      %17 = sbr.rel (0) target = $region5
    $region4: #{tpu_custom_call.1} parent=1 // pred_region
      _
    $region5: #{tpu_custom_call.1} parent=1 // pred_fallthru
      _
    // Predicated region
    $region6: #{tpu_custom_call.1} parent=1 // pred_check
      _
    $region7: #{tpu_custom_call.1} parent=1 // pred_check_branch
      %19 = sbr.rel (0) target = $region9
    $region8: #{tpu_custom_call.1} parent=1 // pred_region
      _
    $region9: #{tpu_custom_call.1} parent=1 // pred_fallthru
      _
    // Predicated region
    $region10: #{tpu_custom_call.1} parent=1 // pred_check
      _
    $region11: #{tpu_custom_call.1} parent=1 // pred_check_branch
      %21 = sbr.rel (0) target = $region13
    $region12: #{tpu_custom_call.1} parent=1 // pred_region
      _
    $region13: #{tpu_custom_call.1} parent=1 // pred_fallthru
      _
    // Predicated region
    $region14: #{tpu_custom_call.1} parent=1 // pred_check
      _
    $region15: #{tpu_custom_call.1} parent=1 // pred_check_branch
      %23 = sbr.rel (0) target = $region17
    $region16: #{tpu_custom_call.1} parent=1 // pred_region
      _
    $region17: #{tpu_custom_call.1} parent=1 // pred_fallthru
      _
    // Predicated region
    $region18: #{tpu_custom_call.1} parent=1 // pred_check
      _
    $region19: #{tpu_custom_call.1} parent=1 // pred_check_branch
      %25 = sbr.rel (0) target = $region21
    $region20: #{tpu_custom_call.1} parent=1 // pred_region
      _
    $region21: #{tpu_custom_call.1} parent=1 // pred_fallthru
      _
    // Predicated region
    $region22: #{tpu_custom_call.1} parent=1 // pred_check
      _
    $region23: #{tpu_custom_call.1} parent=1 // pred_check_branch
      %27 = sbr.rel (0) target = $region25
    $region24: #{tpu_custom_call.1} parent=1 // pred_region
      _
    $region25: #{tpu_custom_call.1} parent=1 // pred_fallthru
      _
    // Predicated region
    $region26: #{tpu_custom_call.1} parent=1 // pred_check
      _
    $region27: #{tpu_custom_call.1} parent=1 // pred_check_branch
      %29 = sbr.rel (0) target = $region29
    $region28: #{tpu_custom_call.1} parent=1 // pred_region
      _
    $region29: #{tpu_custom_call.1} parent=1 // pred_fallthru
      _
    // Predicated region
    $region30: #{tpu_custom_call.1} parent=1 // pred_check
      _
    $region31: #{tpu_custom_call.1} parent=1 // pred_check_branch
      %31 = sbr.rel (0) target = $region33
    $region32: #{tpu_custom_call.1} parent=1 // pred_region
      _
    $region33: #{tpu_custom_call.1} parent=1 // pred_fallthru
      _
    // Predicated region
    $region34: #{tpu_custom_call.1} parent=1 // pred_check
      _
    $region35: #{tpu_custom_call.1} parent=1 // pred_check_branch
      %33 = sbr.rel (0) target = $region37
    $region36: #{tpu_custom_call.1} parent=1 // pred_region
      _
    $region37: #{tpu_custom_call.1} parent=1 // pred_fallthru
      _
    %v34 = vld [vmem:[%s2] sm:$0xff]
    %v35 = vld [vmem:[%s2 + $0x8] sm:$0xff]
    %v36 = vld [vmem:[%s2 + $0x10] sm:$0xff]
    %v37 = vld [vmem:[%s2 + $0x18] sm:$0xff]
    %v38 = vld [vmem:[%s2 + $0x20] sm:$0xff]
    %v39 = vld [vmem:[%s2 + $0x28] sm:$0xff]
    %v40 = vld [vmem:[%s2 + $0x30] sm:$0xff]
    %v41 = vld [vmem:[%s2 + $0x38] sm:$0xff]
    %v42 = vld [vmem:[%s0] sm:$0x7f]
    %v43 = vld [vmem:[%s0 + $0x8] sm:$0x7f]
    %v44 = vld [vmem:[%s3] sm:$0xff]
    %v45 = vld [vmem:[%s3 + $0x8] sm:$0xff]
    %v46 = vld [vmem:[%s3 + $0x10] sm:$0xff]
    %v47 = vld [vmem:[%s3 + $0x18] sm:$0xff]
    %v48 = vld [vmem:[%s3 + $0x20] sm:$0xff]
    %v49 = vld [vmem:[%s3 + $0x28] sm:$0xff]
    %v50 = vld [vmem:[%s3 + $0x30] sm:$0xff]
    %v51 = vld [vmem:[%s3 + $0x38] sm:$0xff]
    %v52 = vld [vmem:[%s1] sm:$0xf]
    %v55 = vunpack.c.l.s4 1983009808
    %v56 = vunpack.c.0.s8 %v55
    %v57 = vlaneseq
    %v58 = vshrl.u32 %v57, 7
    %v59 = vsub.s32 %v56, %v58
    %v60 = vrot.slane %v52, %v59
    %v61 = vcombine.high %v60, %v60
    %vm62 = vcmask 15360
    %v64 = vsel %vm62, %v44, 0
    %v67 = vsel %vm62, %v45, 0
    %v70 = vsel %vm62, %v46, 0
    %v73 = vsel %vm62, %v47, 0
    %v76 = vsel %vm62, %v48, 0
    %v79 = vsel %vm62, %v49, 0
    %v82 = vsel %vm62, %v50, 0
    %v85 = vsel %vm62, %v51, 0
    %vm87 = vcmask 1041408
    %v88 = vsel %vm87, %v60, 0
    %v90 = vsel %vm87, %v61, 0
    %92 = vmatprep.subr.mxu0 %v90
    %93 = vmatpush1.msra.mxu0 %v88
    %94 = vmatprep.subr.mxu0 0.0
    %95 = vmatpush1.msra.mxu0 0.0
    %96 = vmatprep.subr.mxu0 0.0
    %97 = vmatpush1.msra.mxu0 0.0
    %98 = vmatprep.subr.mxu0 0.0
    %99 = vmatpush1.msra.mxu0 0.0
    %100 = vmatprep.subr.mxu0 0.0
    %101 = vmatpush1.msra.mxu0 0.0
    %102 = vmatprep.subr.mxu0 0.0
    %103 = vmatpush1.msra.mxu0 0.0
    %104 = vmatprep.subr.mxu0 0.0
    %105 = vmatpush1.msra.mxu0 0.0
    %106 = vmatprep.subr.mxu0 0.0
    %107 = vmatpush1.msra.mxu0 0.0
    %108 = vmatprep.subr.mxu0 0.0
    %109 = vmatpush1.msra.mxu0 0.0
    %110 = vmatprep.subr.mxu0 0.0
    %111 = vmatpush1.msra.mxu0 0.0
    %112 = vmatprep.subr.mxu0 0.0
    %113 = vmatpush1.msra.mxu0 0.0
    %114 = vmatprep.subr.mxu0 0.0
    %115 = vmatpush1.msra.mxu0 0.0
    %116 = vmatprep.subr.mxu0 0.0
    %117 = vmatpush1.msra.mxu0 0.0
    %118 = vmatprep.subr.mxu0 0.0
    %119 = vmatpush1.msra.mxu0 0.0
    %120 = vmatprep.subr.mxu0 0.0
    %121 = vmatpush1.msra.mxu0 0.0
    %122 = vmatprep.subr.mxu0 0.0
    %123 = vmatpush1.msra.mxu0 0.0
    %124 = vmatprep.subr.mxu0 0.0
    %125 = vmatpush1.msra.mxu0 0.0
    %126 = vmatprep.subr.mxu0 0.0
    %127 = vmatpush1.msra.mxu0 0.0
    %128 = vmatprep.subr.mxu0 0.0
    %129 = vmatpush1.msra.mxu0 0.0
    %130 = vmatprep.subr.mxu0 0.0
    %131 = vmatpush1.msra.mxu0 0.0
    %132 = vmatprep.subr.mxu0 0.0
    %133 = vmatpush1.msra.mxu0 0.0
    %134 = vmatprep.subr.mxu0 0.0
    %135 = vmatpush1.msra.mxu0 0.0
    %136 = vmatprep.subr.mxu0 0.0
    %137 = vmatpush1.msra.mxu0 0.0
    %138 = vmatprep.subr.mxu0 0.0
    %139 = vmatpush1.msra.mxu0 0.0
    %140 = vmatprep.subr.mxu0 0.0
    %141 = vmatpush1.msra.mxu0 0.0
    %142 = vmatprep.subr.mxu0 0.0
    %143 = vmatpush1.msra.mxu0 0.0
    %144 = vmatprep.subr.mxu0 0.0
    %145 = vmatpush1.msra.mxu0 0.0
    %146 = vmatprep.subr.mxu0 0.0
    %147 = vmatpush1.msra.mxu0 0.0
    %148 = vmatprep.subr.mxu0 0.0
    %149 = vmatpush1.msra.mxu0 0.0
    %150 = vmatprep.subr.mxu0 0.0
    %151 = vmatpush1.msra.mxu0 0.0
    %152 = vmatprep.subr.mxu0 0.0
    %153 = vmatpush1.msra.mxu0 0.0
    %154 = vmatprep.subr.mxu0 0.0
    %155 = vmatpush1.msra.mxu0 0.0
    %156 = vmatprep.mubr.f32.mxu0 0.0
    %157 = vmatmul.mubr.f32.gmra.mrb[0].mxu0 %v64
    %v158 = vpop.f32.mrb[0].mxu0
    %v159 = vadd.f32 0.0, %v158
    %v160 = vpop.f32.mrb[0].mxu0
    %v161 = vadd.f32 0.0, %v160
    %162 = vmatprep.mubr.f32.mxu0 0.0
    %163 = vmatmul.mubr.f32.gmra.mrb[0].mxu0 %v67
    %v164 = vpop.f32.mrb[0].mxu0
    %v165 = vadd.f32 0.0, %v164
    %v166 = vpop.f32.mrb[0].mxu0
    %v167 = vadd.f32 0.0, %v166
    %168 = vmatprep.mubr.f32.mxu0 0.0
    %169 = vmatmul.mubr.f32.gmra.mrb[0].mxu0 %v70
    %v170 = vpop.f32.mrb[0].mxu0
    %v171 = vadd.f32 0.0, %v170
    %v172 = vpop.f32.mrb[0].mxu0
    %v173 = vadd.f32 0.0, %v172
    %174 = vmatprep.mubr.f32.mxu0 0.0
    %175 = vmatmul.mubr.f32.gmra.mrb[0].mxu0 %v73
    %v176 = vpop.f32.mrb[0].mxu0
    %v177 = vadd.f32 0.0, %v176
    %v178 = vpop.f32.mrb[0].mxu0
    %v179 = vadd.f32 0.0, %v178
    %180 = vmatprep.mubr.f32.mxu0 0.0
    %181 = vmatmul.mubr.f32.gmra.mrb[0].mxu0 %v76
    %v182 = vpop.f32.mrb[0].mxu0
    %v183 = vadd.f32 0.0, %v182
    %v184 = vpop.f32.mrb[0].mxu0
    %v185 = vadd.f32 0.0, %v184
    %186 = vmatprep.mubr.f32.mxu0 0.0
    %187 = vmatmul.mubr.f32.gmra.mrb[0].mxu0 %v79
    %v188 = vpop.f32.mrb[0].mxu0
    %v189 = vadd.f32 0.0, %v188
    %v190 = vpop.f32.mrb[0].mxu0
    %v191 = vadd.f32 0.0, %v190
    %192 = vmatprep.mubr.f32.mxu0 0.0
    %193 = vmatmul.mubr.f32.gmra.mrb[0].mxu0 %v82
    %v194 = vpop.f32.mrb[0].mxu0
    %v195 = vadd.f32 0.0, %v194
    %v196 = vpop.f32.mrb[0].mxu0
    %v197 = vadd.f32 0.0, %v196
    %198 = vmatprep.mubr.f32.mxu0 0.0
    %199 = vmatmul.mubr.f32.gmra.mrb[0].mxu0 %v85
    %v200 = vpop.f32.mrb[0].mxu0
    %v201 = vadd.f32 0.0, %v200
    %v202 = vpop.f32.mrb[0].mxu0
    %v203 = vadd.f32 0.0, %v202
    %204 = vdwg.mxu0
    %vm205 = vcmask 56320
    %v207 = vsel %vm205, %v34, 0
    %v210 = vsel %vm205, %v35, 0
    %v213 = vsel %vm205, %v36, 0
    %v216 = vsel %vm205, %v37, 0
    %v219 = vsel %vm205, %v38, 0
    %v222 = vsel %vm205, %v39, 0
    %v225 = vsel %vm205, %v40, 0
    %v228 = vsel %vm205, %v41, 0
    %vm230 = vcmask 1046528
    %v232 = vsel %vm230, %v42, 0
    %v235 = vsel %vm230, %v43, 0
    %237 = vmatprep.subr.mxu0 %v235
    %238 = vmatpush1.msra.mxu0 %v232
    %239 = vmatprep.subr.mxu0 0.0
    %240 = vmatpush1.msra.mxu0 0.0
    %241 = vmatprep.subr.mxu0 0.0
    %242 = vmatpush1.msra.mxu0 0.0
    %243 = vmatprep.subr.mxu0 0.0
    %244 = vmatpush1.msra.mxu0 0.0
    %245 = vmatprep.subr.mxu0 0.0
    %246 = vmatpush1.msra.mxu0 0.0
    %247 = vmatprep.subr.mxu0 0.0
    %248 = vmatpush1.msra.mxu0 0.0
    %249 = vmatprep.subr.mxu0 0.0
    %250 = vmatpush1.msra.mxu0 0.0
    %251 = vmatprep.subr.mxu0 0.0
    %252 = vmatpush1.msra.mxu0 0.0
    %253 = vmatprep.subr.mxu0 0.0
    %254 = vmatpush1.msra.mxu0 0.0
    %255 = vmatprep.subr.mxu0 0.0
    %256 = vmatpush1.msra.mxu0 0.0
    %257 = vmatprep.subr.mxu0 0.0
    %258 = vmatpush1.msra.mxu0 0.0
    %259 = vmatprep.subr.mxu0 0.0
    %260 = vmatpush1.msra.mxu0 0.0
    %261 = vmatprep.subr.mxu0 0.0
    %262 = vmatpush1.msra.mxu0 0.0
    %263 = vmatprep.subr.mxu0 0.0
    %264 = vmatpush1.msra.mxu0 0.0
    %265 = vmatprep.subr.mxu0 0.0
    %266 = vmatpush1.msra.mxu0 0.0
    %267 = vmatprep.subr.mxu0 0.0
    %268 = vmatpush1.msra.mxu0 0.0
    %269 = vmatprep.subr.mxu0 0.0
    %270 = vmatpush1.msra.mxu0 0.0
    %271 = vmatprep.subr.mxu0 0.0
    %272 = vmatpush1.msra.mxu0 0.0
    %273 = vmatprep.subr.mxu0 0.0
    %274 = vmatpush1.msra.mxu0 0.0
    %275 = vmatprep.subr.mxu0 0.0
    %276 = vmatpush1.msra.mxu0 0.0
    %277 = vmatprep.subr.mxu0 0.0
    %278 = vmatpush1.msra.mxu0 0.0
    %279 = vmatprep.subr.mxu0 0.0
    %280 = vmatpush1.msra.mxu0 0.0
    %281 = vmatprep.subr.mxu0 0.0
    %282 = vmatpush1.msra.mxu0 0.0
    %283 = vmatprep.subr.mxu0 0.0
    %284 = vmatpush1.msra.mxu0 0.0
    %285 = vmatprep.subr.mxu0 0.0
    %286 = vmatpush1.msra.mxu0 0.0
    %287 = vmatprep.subr.mxu0 0.0
    %288 = vmatpush1.msra.mxu0 0.0
    %289 = vmatprep.subr.mxu0 0.0
    %290 = vmatpush1.msra.mxu0 0.0
    %291 = vmatprep.subr.mxu0 0.0
    %292 = vmatpush1.msra.mxu0 0.0
    %293 = vmatprep.subr.mxu0 0.0
    %294 = vmatpush1.msra.mxu0 0.0
    %295 = vmatprep.subr.mxu0 0.0
    %296 = vmatpush1.msra.mxu0 0.0
    %297 = vmatprep.subr.mxu0 0.0
    %298 = vmatpush1.msra.mxu0 0.0
    %299 = vmatprep.subr.mxu0 0.0
    %300 = vmatpush1.msra.mxu0 0.0
    %301 = vmatprep.mubr.f32.mxu0 0.0
    %302 = vmatmul.mubr.f32.gmra.mrb[0].mxu0 %v207
    %v303 = vpop.f32.mrb[0].mxu0
    %v304 = vadd.f32 %v159, %v303
    %v305 = vpop.f32.mrb[0].mxu0
    %v306 = vadd.f32 %v161, %v305
    %307 = vmatprep.mubr.f32.mxu0 0.0
    %308 = vmatmul.mubr.f32.gmra.mrb[0].mxu0 %v210
    %v309 = vpop.f32.mrb[0].mxu0
    %v310 = vadd.f32 %v165, %v309
    %v311 = vpop.f32.mrb[0].mxu0
    %v312 = vadd.f32 %v167, %v311
    %313 = vmatprep.mubr.f32.mxu0 0.0
    %314 = vmatmul.mubr.f32.gmra.mrb[0].mxu0 %v213
    %v315 = vpop.f32.mrb[0].mxu0
    %v316 = vadd.f32 %v171, %v315
    %v317 = vpop.f32.mrb[0].mxu0
    %v318 = vadd.f32 %v173, %v317
    %319 = vmatprep.mubr.f32.mxu0 0.0
    %320 = vmatmul.mubr.f32.gmra.mrb[0].mxu0 %v216
    %v321 = vpop.f32.mrb[0].mxu0
    %v322 = vadd.f32 %v177, %v321
    %v323 = vpop.f32.mrb[0].mxu0
    %v324 = vadd.f32 %v179, %v323
    %325 = vmatprep.mubr.f32.mxu0 0.0
    %326 = vmatmul.mubr.f32.gmra.mrb[0].mxu0 %v219
    %v327 = vpop.f32.mrb[0].mxu0
    %v328 = vadd.f32 %v183, %v327
    %v329 = vpop.f32.mrb[0].mxu0
    %v330 = vadd.f32 %v185, %v329
    %331 = vmatprep.mubr.f32.mxu0 0.0
    %332 = vmatmul.mubr.f32.gmra.mrb[0].mxu0 %v222
    %v333 = vpop.f32.mrb[0].mxu0
    %v334 = vadd.f32 %v189, %v333
    %v335 = vpop.f32.mrb[0].mxu0
    %v336 = vadd.f32 %v191, %v335
    %337 = vmatprep.mubr.f32.mxu0 0.0
    %338 = vmatmul.mubr.f32.gmra.mrb[0].mxu0 %v225
    %v339 = vpop.f32.mrb[0].mxu0
    %v340 = vadd.f32 %v195, %v339
    %v341 = vpop.f32.mrb[0].mxu0
    %v342 = vadd.f32 %v197, %v341
    %343 = vmatprep.mubr.f32.mxu0 0.0
    %344 = vmatmul.mubr.f32.gmra.mrb[0].mxu0 %v228
    %v345 = vpop.f32.mrb[0].mxu0
    %v346 = vadd.f32 %v201, %v345
    %v347 = vpop.f32.mrb[0].mxu0
    %v348 = vadd.f32 %v203, %v347
    %349 = vdwg.mxu0
    %v350 = vld [vmem:[%s4] sm:$0xff]
    %v351 = vld [vmem:[%s4 + $0x8] sm:$0xff]
    %v352 = vld [vmem:[%s4 + $0x10] sm:$0xff]
    %v353 = vld [vmem:[%s4 + $0x18] sm:$0xff]
    %v354 = vld [vmem:[%s4 + $0x20] sm:$0xff]
    %v355 = vld [vmem:[%s4 + $0x28] sm:$0xff]
    %v356 = vld [vmem:[%s4 + $0x30] sm:$0xff]
    %v357 = vld [vmem:[%s4 + $0x38] sm:$0xff]
    %359 = vset.pattern.permute.xlu0 0
    %360 = vperm.xlu0 %359, %v350
    %v361 = vpop.permute.xlu0 %360
    %364 = vset.pattern.permute.xlu0 0
    %365 = vperm.xlu0 %364, %v351
    %v366 = vpop.permute.xlu0 %365
    %369 = vset.pattern.permute.xlu0 0
    %370 = vperm.xlu0 %369, %v352
    %v371 = vpop.permute.xlu0 %370
    %374 = vset.pattern.permute.xlu0 0
    %375 = vperm.xlu0 %374, %v353
    %v376 = vpop.permute.xlu0 %375
    %379 = vset.pattern.permute.xlu0 0
    %380 = vperm.xlu0 %379, %v354
    %v381 = vpop.permute.xlu0 %380
    %384 = vset.pattern.permute.xlu0 0
    %385 = vperm.xlu0 %384, %v355
    %v386 = vpop.permute.xlu0 %385
    %389 = vset.pattern.permute.xlu0 0
    %390 = vperm.xlu0 %389, %v356
    %v391 = vpop.permute.xlu0 %390
    %394 = vset.pattern.permute.xlu0 0
    %395 = vperm.xlu0 %394, %v357
    %v396 = vpop.permute.xlu0 %395
    %v398 = vadd.f32 %v304, %v361
    %v399 = vadd.f32 %v306, %v361
    %v400 = vadd.f32 %v310, %v366
    %v401 = vadd.f32 %v312, %v366
    %v402 = vadd.f32 %v316, %v371
    %v403 = vadd.f32 %v318, %v371
    %v404 = vadd.f32 %v322, %v376
    %v405 = vadd.f32 %v324, %v376
    %v406 = vadd.f32 %v328, %v381
    %v407 = vadd.f32 %v330, %v381
    %v408 = vadd.f32 %v334, %v386
    %v409 = vadd.f32 %v336, %v386
    %v410 = vadd.f32 %v340, %v391
    %v411 = vadd.f32 %v342, %v391
    %v412 = vadd.f32 %v346, %v396
    %v413 = vadd.f32 %v348, %v396
    %v414 = vmax.f32 %v398, 0.0
    %v415 = vmax.f32 %v399, 0.0
    %v416 = vmax.f32 %v400, 0.0
    %v417 = vmax.f32 %v401, 0.0
    %v418 = vmax.f32 %v402, 0.0
    %v419 = vmax.f32 %v403, 0.0
    %v420 = vmax.f32 %v404, 0.0
    %v421 = vmax.f32 %v405, 0.0
    %v422 = vmax.f32 %v406, 0.0
    %v423 = vmax.f32 %v407, 0.0
    %v424 = vmax.f32 %v408, 0.0
    %v425 = vmax.f32 %v409, 0.0
    %v426 = vmax.f32 %v410, 0.0
    %v427 = vmax.f32 %v411, 0.0
    %v428 = vmax.f32 %v412, 0.0
    %v429 = vmax.f32 %v413, 0.0
    %v430 = vld [vmem:[%s5] sm:$0xff]
    %v431 = vld [vmem:[%s5 + $0x8] sm:$0xff]
    %v432 = vld [vmem:[%s5 + $0x10] sm:$0xff]
    %v433 = vld [vmem:[%s5 + $0x18] sm:$0xff]
    %v434 = vld [vmem:[%s5 + $0x20] sm:$0xff]
    %v435 = vld [vmem:[%s5 + $0x28] sm:$0xff]
    %v436 = vld [vmem:[%s5 + $0x30] sm:$0xff]
    %v437 = vld [vmem:[%s5 + $0x38] sm:$0xff]
    %v438 = vld [vmem:[%s6] sm:$0xff]
    %v439 = vld [vmem:[%s6 + $0x8] sm:$0xff]
    %v440 = vld [vmem:[%s6 + $0x10] sm:$0xff]
    %v441 = vld [vmem:[%s6 + $0x18] sm:$0xff]
    %v442 = vld [vmem:[%s6 + $0x20] sm:$0xff]
    %v443 = vld [vmem:[%s6 + $0x28] sm:$0xff]
    %v444 = vld [vmem:[%s6 + $0x30] sm:$0xff]
    %v445 = vld [vmem:[%s6 + $0x38] sm:$0xff]
    %447 = vset.pattern.permute.xlu0 0
    %448 = vperm.xlu0 %447, %v438
    %v449 = vpop.permute.xlu0 %448
    %452 = vset.pattern.permute.xlu0 0
    %453 = vperm.xlu0 %452, %v439
    %v454 = vpop.permute.xlu0 %453
    %457 = vset.pattern.permute.xlu0 0
    %458 = vperm.xlu0 %457, %v440
    %v459 = vpop.permute.xlu0 %458
    %462 = vset.pattern.permute.xlu0 0
    %463 = vperm.xlu0 %462, %v441
    %v464 = vpop.permute.xlu0 %463
    %467 = vset.pattern.permute.xlu0 0
    %468 = vperm.xlu0 %467, %v442
    %v469 = vpop.permute.xlu0 %468
    %472 = vset.pattern.permute.xlu0 0
    %473 = vperm.xlu0 %472, %v443
    %v474 = vpop.permute.xlu0 %473
    %477 = vset.pattern.permute.xlu0 0
    %478 = vperm.xlu0 %477, %v444
    %v479 = vpop.permute.xlu0 %478
    %482 = vset.pattern.permute.xlu0 0
    %483 = vperm.xlu0 %482, %v445
    %v484 = vpop.permute.xlu0 %483
    %vm486 = vcmask 523264
    %v488 = vsel %vm486, %v430, 0
    %v491 = vsel %vm486, %v431, 0
    %v494 = vsel %vm486, %v432, 0
    %v497 = vsel %vm486, %v433, 0
    %v500 = vsel %vm486, %v434, 0
    %v503 = vsel %vm486, %v435, 0
    %v506 = vsel %vm486, %v436, 0
    %v509 = vsel %vm486, %v437, 0
    %511 = vmatprep.subr.mxu0 %v415
    %512 = vmatpush1.msra.mxu0 %v414
    %513 = vmatprep.subr.mxu0 %v417
    %514 = vmatpush1.msra.mxu0 %v416
    %515 = vmatprep.subr.mxu0 %v419
    %516 = vmatpush1.msra.mxu0 %v418
    %517 = vmatprep.subr.mxu0 %v421
    %518 = vmatpush1.msra.mxu0 %v420
    %519 = vmatprep.subr.mxu0 %v423
    %520 = vmatpush1.msra.mxu0 %v422
    %521 = vmatprep.subr.mxu0 %v425
    %522 = vmatpush1.msra.mxu0 %v424
    %523 = vmatprep.subr.mxu0 %v427
    %524 = vmatpush1.msra.mxu0 %v426
    %525 = vmatprep.subr.mxu0 %v429
    %526 = vmatpush1.msra.mxu0 %v428
    %527 = vmatprep.subr.mxu0 0.0
    %528 = vmatpush1.msra.mxu0 0.0
    %529 = vmatprep.subr.mxu0 0.0
    %530 = vmatpush1.msra.mxu0 0.0
    %531 = vmatprep.subr.mxu0 0.0
    %532 = vmatpush1.msra.mxu0 0.0
    %533 = vmatprep.subr.mxu0 0.0
    %534 = vmatpush1.msra.mxu0 0.0
    %535 = vmatprep.subr.mxu0 0.0
    %536 = vmatpush1.msra.mxu0 0.0
    %537 = vmatprep.subr.mxu0 0.0
    %538 = vmatpush1.msra.mxu0 0.0
    %539 = vmatprep.subr.mxu0 0.0
    %540 = vmatpush1.msra.mxu0 0.0
    %541 = vmatprep.subr.mxu0 0.0
    %542 = vmatpush1.msra.mxu0 0.0
    %543 = vmatprep.subr.mxu0 0.0
    %544 = vmatpush1.msra.mxu0 0.0
    %545 = vmatprep.subr.mxu0 0.0
    %546 = vmatpush1.msra.mxu0 0.0
    %547 = vmatprep.subr.mxu0 0.0
    %548 = vmatpush1.msra.mxu0 0.0
    %549 = vmatprep.subr.mxu0 0.0
    %550 = vmatpush1.msra.mxu0 0.0
    %551 = vmatprep.subr.mxu0 0.0
    %552 = vmatpush1.msra.mxu0 0.0
    %553 = vmatprep.subr.mxu0 0.0
    %554 = vmatpush1.msra.mxu0 0.0
    %555 = vmatprep.subr.mxu0 0.0
    %556 = vmatpush1.msra.mxu0 0.0
    %557 = vmatprep.subr.mxu0 0.0
    %558 = vmatpush1.msra.mxu0 0.0
    %559 = vmatprep.subr.mxu0 0.0
    %560 = vmatpush1.msra.mxu0 0.0
    %561 = vmatprep.subr.mxu0 0.0
    %562 = vmatpush1.msra.mxu0 0.0
    %563 = vmatprep.subr.mxu0 0.0
    %564 = vmatpush1.msra.mxu0 0.0
    %565 = vmatprep.subr.mxu0 0.0
    %566 = vmatpush1.msra.mxu0 0.0
    %567 = vmatprep.subr.mxu0 0.0
    %568 = vmatpush1.msra.mxu0 0.0
    %569 = vmatprep.subr.mxu0 0.0
    %570 = vmatpush1.msra.mxu0 0.0
    %571 = vmatprep.subr.mxu0 0.0
    %572 = vmatpush1.msra.mxu0 0.0
    %573 = vmatprep.subr.mxu0 0.0
    %574 = vmatpush1.msra.mxu0 0.0
    %575 = vmatprep.mubr.f32.mxu0 0.0
    %576 = vmatmul.mubr.f32.gmra.mrb[0].mxu0 %v488
    %v577 = vpop.f32.mrb[0].mxu0
    %v578 = vadd.f32 %v449, %v577
    %v579 = vpop.f32.mrb[0].mxu0
    %v580 = vadd.f32 %v449, %v579
    %581 = vmatprep.mubr.f32.mxu0 0.0
    %582 = vmatmul.mubr.f32.gmra.mrb[0].mxu0 %v491
    %v583 = vpop.f32.mrb[0].mxu0
    %v584 = vadd.f32 %v454, %v583
    %v585 = vpop.f32.mrb[0].mxu0
    %v586 = vadd.f32 %v454, %v585
    %587 = vmatprep.mubr.f32.mxu0 0.0
    %588 = vmatmul.mubr.f32.gmra.mrb[0].mxu0 %v494
    %v589 = vpop.f32.mrb[0].mxu0
    %v590 = vadd.f32 %v459, %v589
    %v591 = vpop.f32.mrb[0].mxu0
    %v592 = vadd.f32 %v459, %v591
    %593 = vmatprep.mubr.f32.mxu0 0.0
    %594 = vmatmul.mubr.f32.gmra.mrb[0].mxu0 %v497
    %v595 = vpop.f32.mrb[0].mxu0
    %v596 = vadd.f32 %v464, %v595
    %v597 = vpop.f32.mrb[0].mxu0
    %v598 = vadd.f32 %v464, %v597
    %599 = vmatprep.mubr.f32.mxu0 0.0
    %600 = vmatmul.mubr.f32.gmra.mrb[0].mxu0 %v500
    %v601 = vpop.f32.mrb[0].mxu0
    %v602 = vadd.f32 %v469, %v601
    %v603 = vpop.f32.mrb[0].mxu0
    %v604 = vadd.f32 %v469, %v603
    %605 = vmatprep.mubr.f32.mxu0 0.0
    %606 = vmatmul.mubr.f32.gmra.mrb[0].mxu0 %v503
    %v607 = vpop.f32.mrb[0].mxu0
    %v608 = vadd.f32 %v474, %v607
    %v609 = vpop.f32.mrb[0].mxu0
    %v610 = vadd.f32 %v474, %v609
    %611 = vmatprep.mubr.f32.mxu0 0.0
    %612 = vmatmul.mubr.f32.gmra.mrb[0].mxu0 %v506
    %v613 = vpop.f32.mrb[0].mxu0
    %v614 = vadd.f32 %v479, %v613
    %v615 = vpop.f32.mrb[0].mxu0
    %v616 = vadd.f32 %v479, %v615
    %617 = vmatprep.mubr.f32.mxu0 0.0
    %618 = vmatmul.mubr.f32.gmra.mrb[0].mxu0 %v509
    %v619 = vpop.f32.mrb[0].mxu0
    %v620 = vadd.f32 %v484, %v619
    %v621 = vpop.f32.mrb[0].mxu0
    %v622 = vadd.f32 %v484, %v621
    %623 = vdwg.mxu0
    %v624 = vmax.f32 %v578, 0.0
    %v625 = vmax.f32 %v580, 0.0
    %v626 = vmax.f32 %v584, 0.0
    %v627 = vmax.f32 %v586, 0.0
    %v628 = vmax.f32 %v590, 0.0
    %v629 = vmax.f32 %v592, 0.0
    %v630 = vmax.f32 %v596, 0.0
    %v631 = vmax.f32 %v598, 0.0
    %v632 = vmax.f32 %v602, 0.0
    %v633 = vmax.f32 %v604, 0.0
    %v634 = vmax.f32 %v608, 0.0
    %v635 = vmax.f32 %v610, 0.0
    %v636 = vmax.f32 %v614, 0.0
    %v637 = vmax.f32 %v616, 0.0
    %v638 = vmax.f32 %v620, 0.0
    %v639 = vmax.f32 %v622, 0.0
    %v640 = vld [vmem:[%s7] sm:$0x1]
    %s641 = sld [smem:[#allocation2]]
    %v642 = vstv %s641
    %v644 = vsel %vm486, %v640, 0
    %646 = vmatprep.subr.mxu0 %v625
    %647 = vmatpush1.msra.mxu0 %v624
    %648 = vmatprep.subr.mxu0 %v627
    %649 = vmatpush1.msra.mxu0 %v626
    %650 = vmatprep.subr.mxu0 %v629
    %651 = vmatpush1.msra.mxu0 %v628
    %652 = vmatprep.subr.mxu0 %v631
    %653 = vmatpush1.msra.mxu0 %v630
    %654 = vmatprep.subr.mxu0 %v633
    %655 = vmatpush1.msra.mxu0 %v632
    %656 = vmatprep.subr.mxu0 %v635
    %657 = vmatpush1.msra.mxu0 %v634
    %658 = vmatprep.subr.mxu0 %v637
    %659 = vmatpush1.msra.mxu0 %v636
    %660 = vmatprep.subr.mxu0 %v639
    %661 = vmatpush1.msra.mxu0 %v638
    %662 = vmatprep.subr.mxu0 0.0
    %663 = vmatpush1.msra.mxu0 0.0
    %664 = vmatprep.subr.mxu0 0.0
    %665 = vmatpush1.msra.mxu0 0.0
    %666 = vmatprep.subr.mxu0 0.0
    %667 = vmatpush1.msra.mxu0 0.0
    %668 = vmatprep.subr.mxu0 0.0
    %669 = vmatpush1.msra.mxu0 0.0
    %670 = vmatprep.subr.mxu0 0.0
    %671 = vmatpush1.msra.mxu0 0.0
    %672 = vmatprep.subr.mxu0 0.0
    %673 = vmatpush1.msra.mxu0 0.0
    %674 = vmatprep.subr.mxu0 0.0
    %675 = vmatpush1.msra.mxu0 0.0
    %676 = vmatprep.subr.mxu0 0.0
    %677 = vmatpush1.msra.mxu0 0.0
    %678 = vmatprep.subr.mxu0 0.0
    %679 = vmatpush1.msra.mxu0 0.0
    %680 = vmatprep.subr.mxu0 0.0
    %681 = vmatpush1.msra.mxu0 0.0
    %682 = vmatprep.subr.mxu0 0.0
    %683 = vmatpush1.msra.mxu0 0.0
    %684 = vmatprep.subr.mxu0 0.0
    %685 = vmatpush1.msra.mxu0 0.0
    %686 = vmatprep.subr.mxu0 0.0
    %687 = vmatpush1.msra.mxu0 0.0
    %688 = vmatprep.subr.mxu0 0.0
    %689 = vmatpush1.msra.mxu0 0.0
    %690 = vmatprep.subr.mxu0 0.0
    %691 = vmatpush1.msra.mxu0 0.0
    %692 = vmatprep.subr.mxu0 0.0
    %693 = vmatpush1.msra.mxu0 0.0
    %694 = vmatprep.subr.mxu0 0.0
    %695 = vmatpush1.msra.mxu0 0.0
    %696 = vmatprep.subr.mxu0 0.0
    %697 = vmatpush1.msra.mxu0 0.0
    %698 = vmatprep.subr.mxu0 0.0
    %699 = vmatpush1.msra.mxu0 0.0
    %700 = vmatprep.subr.mxu0 0.0
    %701 = vmatpush1.msra.mxu0 0.0
    %702 = vmatprep.subr.mxu0 0.0
    %703 = vmatpush1.msra.mxu0 0.0
    %704 = vmatprep.subr.mxu0 0.0
    %705 = vmatpush1.msra.mxu0 0.0
    %706 = vmatprep.subr.mxu0 0.0
    %707 = vmatpush1.msra.mxu0 0.0
    %708 = vmatprep.subr.mxu0 0.0
    %709 = vmatpush1.msra.mxu0 0.0
    %710 = vmatprep.mubr.f32.mxu0 0.0
    %711 = vmatmul.mubr.f32.gmra.mrb[0].mxu0 %v644
    %v712 = vpop.f32.mrb[0].mxu0
    %v713 = vadd.f32 %v642, %v712
    %v714 = vpop.f32.mrb[0].mxu0
    %v715 = vadd.f32 %v642, %v714
    %716 = vdwg.mxu0
    %v719 = vcombine.low %v713, %v715
    %v721 = vunpack.c.l.s4 1966171168
    %v722 = vunpack.c.0.s8 %v721
    %v723 = vlaneseq
    %v724 = vshrl.u32 %v723, 7
    %v725 = vsub.s32 %v722, %v724
    %v726 = vrot.slane %v719, %v725
    %v728 = vunpack.c.l.s4 1966171168
    %v729 = vunpack.c.0.s8 %v728
    %v730 = vlaneseq
    %v731 = vshrl.u32 %v730, 7
    %v732 = vsub.s32 %v729, %v731
    %v733 = vrot.slane %v726, %v732
    %v735 = vlaneseq
    %vm736 = vcmp.ge.s32.totalorder %v735, 0
    %vm737 = vcmp.lt.s32.totalorder %v735, 256
    %vm738 = vmand %vm736, %vm737
    %739 = vst.msk [vmem:[#allocation3] sm:$0x3] %vm738, %v733
    // Predicated region
    $region38: #{tpu_custom_call.1} parent=1 // pred_check
      _
    $region39: #{tpu_custom_call.1} parent=1 // pred_check_branch
      %741 = sbr.rel (0) target = $region41
    $region40: #{tpu_custom_call.1} parent=1 // pred_region
      %s743 = ssub.s32 32, 32
      %744 = vsyncadd [#allocation4], %s743
      %s746 = sshll.u32 [#allocation3], 4
      %s747 = int_to_ptr.vmem [resolvable:$true] %s746
      %749 = dma.vmem_to_hbm [thread:$0]  %s747, 32, %s9, [#allocation4]
    $region41: #{tpu_custom_call.1} parent=1 // pred_fallthru
      _
    // Predicated region
    $region42: #{tpu_custom_call.1} parent=1 // pred_check
      _
    $region43: #{tpu_custom_call.1} parent=1 // pred_check_branch
      %751 = sbr.rel (0) target = $region45
    $region44: #{tpu_custom_call.1} parent=1 // pred_region
      %752 = dma.done [#allocation4], 32
    $region45: #{tpu_custom_call.1} parent=1 // pred_fallthru
      _
    %753 = vsyncpa [#allocation4], 1

</llo_original>
